<compile_context>
chip_gen: v6e
topology: v6e:2x2x1
jax: 0.10.0
libtpu: 0.0.40
codegen_flags: <defaults>
</compile_context>

<pallas_src>
import functools

import jax
import jax.numpy as jnp
from jax.experimental import pallas as pl
from jax.experimental.pallas import tpu as pltpu


def _round_up(x, m):
    return ((x + m - 1) // m) * m


def _focal_loss_kernel(logits_ref, target_ref, out_ref, acc_ref, *, gamma, n_total):
    i = pl.program_id(0)

    @pl.when(i == 0)
    def _init():
        acc_ref[0] = jnp.float32(0.0)

    logits = logits_ref[...].astype(jnp.float32)            # (tile_n, C)
    tgt = target_ref[...]                                    # (tile_n, 1) int32
    tn, c = logits.shape

    # Mask rows past the true N (ragged last tile reads unspecified padding);
    # zeroing keeps exp/log finite in those rows.
    row = i * tn + jax.lax.broadcasted_iota(jnp.int32, (tn, 1), 0)
    valid = row < n_total                                    # (tile_n, 1) bool
    logits = jnp.where(valid, logits, 0.0)

    # Numerically stable log-softmax cross-entropy on shifted logits only.
    row_max = jnp.max(logits, axis=-1, keepdims=True)        # (tile_n, 1)
    shifted = logits - row_max
    lse_shifted = jnp.log(jnp.sum(jnp.exp(shifted), axis=-1, keepdims=True))

    # Gather the target-class (shifted) logit via a lane select + row reduce
    # (avoids unsupported dynamic gather on TPU, and the one-hot cast/multiply).
    col = jax.lax.broadcasted_iota(jnp.int32, (tn, c), 1)
    tgt_shifted = jnp.sum(jnp.where(col == tgt, shifted, 0.0),
                          axis=-1, keepdims=True)

    ce = lse_shifted - tgt_shifted                           # CE, reduction='none'
    pt = jnp.exp(-ce)
    one_minus_pt = 1.0 - pt

    # Focal weight (1 - pt) ** gamma; integer gamma -> pure VPU multiplies.
    g = float(gamma)
    if g.is_integer() and 0.0 <= g <= 8.0:
        w = jnp.ones_like(one_minus_pt)
        for _ in range(int(g)):
            w = w * one_minus_pt
    else:
        w = one_minus_pt ** g

    focal = jnp.where(valid, w * ce, 0.0)
    acc_ref[0] += jnp.sum(focal)

    @pl.when(i == pl.num_programs(0) - 1)
    def _finalize():
        out_ref[0, 0] = acc_ref[0] * (1.0 / n_total)         # reduction: mean


def focal_loss(logits, target, gamma=2, tile_n=None):
    """logits: (N, C) float (f32 or bf16), target: (N,) int -> scalar f32."""
    n, c = logits.shape
    target2d = target.astype(jnp.int32).reshape(n, 1)

    itemsize = jnp.dtype(logits.dtype).itemsize
    if tile_n is None:
        # ~2 MiB logits tile (x2 double-buffered ~= 4 MiB) -> safe on v7x's
        # 64 MiB VMEM while large enough to sit near the HBM roofline and
        # amortize the ~0.35 us per-grid-step overhead even when C is small.
        rows = max((2 * 1024 * 1024) // max(c * itemsize, 1), 8)
        tile_n = min(rows, _round_up(n, 8))
    tile_n = int(max(8, min(_round_up(int(tile_n), 8), _round_up(n, 8))))

    num_tiles = pl.cdiv(n, tile_n)

    cost = pl.CostEstimate(
        flops=int(8 * n * c + 12 * n),
        transcendentals=int(n * c + 2 * n),
        bytes_accessed=int(n * c * itemsize + n * 4 + 4),
    )

    grid_spec = pltpu.PrefetchScalarGridSpec(
        num_scalar_prefetch=0,
        grid=(num_tiles,),
        in_specs=[
            pl.BlockSpec((tile_n, c), lambda i: (i, 0)),   # logits tile (VMEM)
            pl.BlockSpec((tile_n, 1), lambda i: (i, 0)),   # target tile (VMEM)
        ],
        out_specs=pl.BlockSpec(memory_space=pltpu.MemorySpace.SMEM),
        scratch_shapes=[pltpu.SMEM((1,), jnp.float32)],    # running scalar sum
    )

    out = pl.pallas_call(
        functools.partial(_focal_loss_kernel, gamma=gamma, n_total=n),
        out_shape=jax.ShapeDtypeStruct((1, 1), jnp.float32),
        grid_spec=grid_spec,
        compiler_params=pltpu.CompilerParams(
            dimension_semantics=("arbitrary",),            # grid axis is a reduction
            vmem_limit_bytes=32 * 1024 * 1024,
        ),
        cost_estimate=cost,
    )(logits, target2d)                                    # no wrapper up-cast
    return out[0, 0]


def _focal_loss_ref(logits, target, gamma=2):
    logits = logits.astype(jnp.float32)
    logp = jax.nn.log_softmax(logits, axis=-1)
    ce = -jnp.take_along_axis(logp, target[:, None].astype(jnp.int32), axis=-1)[:, 0]
    pt = jnp.exp(-ce)
    return jnp.mean(((1.0 - pt) ** gamma) * ce)


if __name__ == "__main__":
    key = jax.random.PRNGKey(0)
    k1, k2 = jax.random.split(key)
    N, C = 60, 8  # N not a multiple of the row tile -> exercises grid + masking
    logits = jax.random.normal(k1, (N, C), dtype=jnp.float32)
    target = jax.random.randint(k2, (N,), 0, C, dtype=jnp.int32)

    # f32 path, forced small tile -> 4-step grid with a ragged last tile.
    loss = focal_loss(logits, target, gamma=2, tile_n=16)
    jax.block_until_ready(loss)
    ref = _focal_loss_ref(logits, target, gamma=2)
    assert jnp.allclose(loss, ref, atol=1e-5, rtol=1e-5), (loss, ref)

    # Auto tile (single grid step here) must match too.
    loss_auto = focal_loss(logits, target, gamma=2)
    jax.block_until_ready(loss_auto)
    assert jnp.allclose(loss_auto, ref, atol=1e-5, rtol=1e-5), (loss_auto, ref)

    # bf16 path: passes through the BlockSpec un-upcast, cast happens in-kernel.
    logits_bf16 = logits.astype(jnp.bfloat16)
    loss_bf16 = focal_loss(logits_bf16, target, gamma=2)
    jax.block_until_ready(loss_bf16)
    ref_bf16 = _focal_loss_ref(logits_bf16.astype(jnp.float32), target, gamma=2)
    assert jnp.allclose(loss_bf16, ref_bf16, atol=1e-4, rtol=1e-4), (loss_bf16, ref_bf16)

    print("KERNEL_OK")
</pallas_src>

<mosaic_0001>
module attributes {stable_mosaic.version = 11 : i64} {
  func.func @_focal_loss_kernel(%arg0: i32, %arg1: memref<16x8xf32, #tpu.memory_space<vmem>>, %arg2: memref<16x1xi32, #tpu.memory_space<vmem>>, %arg3: memref<1x1xf32, #tpu.memory_space<smem>>, %arg4: memref<1xf32, #tpu.memory_space<smem>>) attributes {dimension_semantics = [#tpu.dimension_semantics<arbitrary>], iteration_bounds = array<i64: 4>, scalar_prefetch = 0 : i64, scratch_operands = 1 : i64, tpu.core_type = #tpu.core_type<tc>, window_params = [{transform_indices = @transform_0, window_bounds = array<i64: 16, 8>}, {transform_indices = @transform_1, window_bounds = array<i64: 16, 1>}, {transform_indices = @transform_2, window_bounds = array<i64: 1, 1>}]} {
    %c0_i32 = arith.constant 0 : i32
    %0 = arith.cmpi eq, %arg0, %c0_i32 : i32
    %1 = arith.extui %0 : i1 to i32
    %c0_i32_0 = arith.constant 0 : i32
    %2 = arith.cmpi ne, %1, %c0_i32_0 : i32
    scf.if %2 {
      %cst_16 = arith.constant 0.000000e+00 : f32
      %c0_17 = arith.constant 0 : index
      %52 = memref.load %arg4[%c0_17] : memref<1xf32, #tpu.memory_space<smem>>
      memref.store %cst_16, %arg4[%c0_17] : memref<1xf32, #tpu.memory_space<smem>>
    } else {
    }
    %c0 = arith.constant 0 : index
    %c0_1 = arith.constant 0 : index
    %3 = vector.load %arg1[%c0, %c0_1] : memref<16x8xf32, #tpu.memory_space<vmem>>, vector<16x8xf32>
    %c0_2 = arith.constant 0 : index
    %c0_3 = arith.constant 0 : index
    %4 = vector.load %arg2[%c0_2, %c0_3] : memref<16x1xi32, #tpu.memory_space<vmem>>, vector<16x1xi32>
    %c16_i32 = arith.constant 16 : i32
    %5 = arith.muli %arg0, %c16_i32 : i32
    %6 = tpu.iota {dimensions = array<i32: 0>} : vector<16x1xi32>
    %7 = vector.broadcast %5 : i32 to vector<16x1xi32>
    %8 = arith.addi %7, %6 : vector<16x1xi32>
    %c60_i32 = arith.constant 60 : i32
    %9 = vector.broadcast %c60_i32 : i32 to vector<16x1xi32>
    %10 = arith.cmpi slt, %8, %9 : vector<16x1xi32>
    %cst = arith.constant 0.000000e+00 : f32
    %11 = vector.shape_cast %10 : vector<16x1xi1> to vector<16x1xi1>
    %12 = vector.broadcast %11 : vector<16x1xi1> to vector<16x8xi1>
    %13 = vector.broadcast %cst : f32 to vector<16x8xf32>
    %14 = arith.select %12, %3, %13 : vector<16x8xi1>, vector<16x8xf32>
    %cst_4 = arith.constant dense<0xFF800000> : vector<16xf32>
    %15 = vector.multi_reduction <maximumf>, %14, %cst_4 [1] : vector<16x8xf32> to vector<16xf32>
    %16 = vector.shape_cast %15 : vector<16xf32> to vector<16x1xf32>
    %17 = vector.broadcast %16 : vector<16x1xf32> to vector<16x8xf32>
    %18 = arith.subf %14, %17 : vector<16x8xf32>
    %19 = math.exp %18 : vector<16x8xf32>
    %cst_5 = arith.constant dense<0.000000e+00> : vector<16xf32>
    %20 = vector.multi_reduction <add>, %19, %cst_5 [1] : vector<16x8xf32> to vector<16xf32>
    %21 = vector.shape_cast %20 : vector<16xf32> to vector<16x1xf32>
    %22 = math.log %21 : vector<16x1xf32>
    %23 = tpu.iota {dimensions = array<i32: 1>} : vector<16x8xi32>
    %24 = vector.broadcast %4 : vector<16x1xi32> to vector<16x8xi32>
    %25 = arith.cmpi eq, %23, %24 : vector<16x8xi32>
    %cst_6 = arith.constant 0.000000e+00 : f32
    %26 = vector.broadcast %cst_6 : f32 to vector<16x8xf32>
    %27 = arith.select %25, %18, %26 : vector<16x8xi1>, vector<16x8xf32>
    %cst_7 = arith.constant dense<0.000000e+00> : vector<16xf32>
    %28 = vector.multi_reduction <add>, %27, %cst_7 [1] : vector<16x8xf32> to vector<16xf32>
    %29 = vector.shape_cast %28 : vector<16xf32> to vector<16x1xf32>
    %30 = arith.subf %22, %29 : vector<16x1xf32>
    %cst_8 = arith.constant 0.000000e+00 : f32
    %31 = vector.broadcast %cst_8 : f32 to vector<16x1xf32>
    %32 = arith.subf %31, %30 : vector<16x1xf32>
    %33 = math.exp %32 : vector<16x1xf32>
    %cst_9 = arith.constant 1.000000e+00 : f32
    %34 = vector.broadcast %cst_9 : f32 to vector<16x1xf32>
    %35 = arith.subf %34, %33 : vector<16x1xf32>
    %cst_10 = arith.constant 1.000000e+00 : f32
    %36 = vector.broadcast %cst_10 : f32 to vector<16x1xf32>
    %37 = arith.mulf %36, %35 : vector<16x1xf32>
    %38 = arith.mulf %37, %35 : vector<16x1xf32>
    %39 = arith.mulf %38, %30 : vector<16x1xf32>
    %cst_11 = arith.constant 0.000000e+00 : f32
    %40 = vector.broadcast %cst_11 : f32 to vector<16x1xf32>
    %41 = arith.select %10, %39, %40 : vector<16x1xi1>, vector<16x1xf32>
    %c0_12 = arith.constant 0 : index
    %42 = memref.load %arg4[%c0_12] : memref<1xf32, #tpu.memory_space<smem>>
    %43 = vector.shape_cast %41 : vector<16x1xf32> to vector<1x16x1xf32>
    %cst_13 = arith.constant dense<0.000000e+00> : vector<1xf32>
    %44 = vector.multi_reduction <add>, %43, %cst_13 [1, 2] : vector<1x16x1xf32> to vector<1xf32>
    %45 = vector.shape_cast %44 : vector<1xf32> to vector<1x1x1xf32>
    %46 = vector.extract %45[0, 0, 0] : f32 from vector<1x1x1xf32>
    %47 = arith.addf %42, %46 : f32
    %c0_14 = arith.constant 0 : index
    %48 = memref.load %arg4[%c0_14] : memref<1xf32, #tpu.memory_space<smem>>
    memref.store %47, %arg4[%c0_14] : memref<1xf32, #tpu.memory_space<smem>>
    %c3_i32 = arith.constant 3 : i32
    %49 = arith.cmpi eq, %arg0, %c3_i32 : i32
    %50 = arith.extui %49 : i1 to i32
    %c0_i32_15 = arith.constant 0 : i32
    %51 = arith.cmpi ne, %50, %c0_i32_15 : i32
    scf.if %51 {
      %c0_16 = arith.constant 0 : index
      %52 = memref.load %arg4[%c0_16] : memref<1xf32, #tpu.memory_space<smem>>
      %cst_17 = arith.constant 0.0166666675 : f32
      %53 = arith.mulf %52, %cst_17 : f32
      %c0_18 = arith.constant 0 : index
      %c0_19 = arith.constant 0 : index
      %54 = memref.load %arg3[%c0_18, %c0_19] : memref<1x1xf32, #tpu.memory_space<smem>>
      memref.store %53, %arg3[%c0_18, %c0_19] : memref<1x1xf32, #tpu.memory_space<smem>>
    } else {
    }
    return
  }
  func.func @transform_0(%arg0: i32) -> (i32, i32) {
    %c0_i32 = arith.constant 0 : i32
    %c0_i32_0 = arith.constant 0 : i32
    return %arg0, %c0_i32 : i32, i32
  }
  func.func @transform_1(%arg0: i32) -> (i32, i32) {
    %c0_i32 = arith.constant 0 : i32
    %c0_i32_0 = arith.constant 0 : i32
    return %arg0, %c0_i32 : i32, i32
  }
  func.func @transform_2(%arg0: i32) -> (i32, i32) {
    %c0_i32 = arith.constant 0 : i32
    %c0_i32_0 = arith.constant 0 : i32
    %c0_i32_1 = arith.constant 0 : i32
    return %c0_i32, %c0_i32_0 : i32, i32
  }
}

</mosaic_0001>

<llo_original>
// kernel: tpu_custom_call.1
$region0: #{tpu_custom_call.1}
  #allocation0 [shape = 'u32[]', space=smem, size = 0x4, offset = 0x4, fixed_abs, tag = 'smem constant byte address 0x4 - core index']
  #allocation1 [shape = 'u32[144,128]{1,0:T(1,128)}', space=vmem, size = 0x12000, scoped, tag = 'internal scratch']
  #allocation2 [shape = 'f32[1]{0:T(128)}', space=smem, size = 0x200, scoped, tag = 'scratch operand']
  %s0 = inlined_call_operand.vmem [shape: f32[60,8], index: 0, kind: input, shape index: {}]
  %s1 = inlined_call_operand.vmem [shape: s32[60,1], index: 1, kind: input, shape index: {}]
  %s2 = inlined_call_operand.hbm [shape: f32[1,1], index: 2, kind: output, shape index: {}]
  %s3 = sld [smem:[#allocation0]]
  $region49: #{tpu_custom_call.1} parent=0
    _
  %s5 = ssub.s32 1, %s3
  %s6 = scalar_select 0, %s5, %s3
  $region1: #{tpu_custom_call.1} parent=0
    #allocation3 [shape = 'u8[512]{0}', space=smem, size = 0x200, scoped, tag = 'output window, operand 0, single buffered']
    #allocation4 [shape = 's32[2]{0}', space=sflag, size = 0x8, scoped, tag = 'scoped memory for tpu_custom_call.1']
    %7 = vsyncpa [#allocation4], 0
    loop: start=0, step=1, limit=6
    $region2: #{tpu_custom_call.1} parent=1 // loop_pre_header
      _
    $region3: #{tpu_custom_call.1} parent=1 // loop_header
      %s9 = sphi 0, %s13
      %p10 = scmp.ge.s32.totalorder %s9, 6
      %s19 = sphi 0, %s21
      %s22 = sphi 0, %s19
      %s23 = sphi 0, %s22
      %s39 = sphi 0, %s23
      %s45 = sphi 0, %s47
      %s48 = sphi 0, %s45
      %s49 = sphi 0, %s48
      %s65 = sphi 0, %s49
      %s69 = sphi 0, %s69
      %s71 = sphi 0, %s69
      %s72 = sphi 0, %s71
      %s86 = sphi 0, %s72
    $region4: #{tpu_custom_call.1} parent=1 // loop_header_branch
      %12 = sbr.rel (%p10) target = $region8
    $region5: #{tpu_custom_call.1} parent=1 // loop_body
      %s14 = ssub.s32 %s9, 1
      %s15 = ssub.s32 %s9, 2
      %s16 = sadd.s32 %s9, 1
      %s17 = ssub.s32 %s9, %s16
      %p18 = scmp.eq.s32.totalorder %s17, 0
      %s20 = sadd.s32 %s19, 1
      %s21 = scalar_select %p18, %s19, %s20
      %p24 = pneg %p18
      %p25 = scmp.eq.s32.totalorder %s9, 3
      %p26 = por %p24, %p25
      %p27 = scmp.ne.s32.totalorder %s19, %s22
      %p28 = scmp.eq.s32.totalorder %s9, 0
      %p29 = por %p27, %p28
      %p30 = scmp.ne.s32.totalorder %s19, %s22
      %p31 = scmp.eq.s32.totalorder %s14, 3
      %p32 = por %p30, %p31
      %p33 = scmp.ne.s32.totalorder %s22, %s23
      %p34 = scmp.eq.s32.totalorder %s14, 0
      %p35 = por %p33, %p34
      %p36 = scmp.ne.s32.totalorder %s22, %s23
      %p37 = scmp.eq.s32.totalorder %s15, 3
      %p38 = por %p36, %p37
      %p40 = scmp.ne.s32.totalorder %s23, %s39
      %p41 = scmp.eq.s32.totalorder %s15, 0
      %p42 = por %p40, %p41
      %s43 = ssub.s32 %s9, %s16
      %p44 = scmp.eq.s32.totalorder %s43, 0
      %s46 = sadd.s32 %s45, 1
      %s47 = scalar_select %p44, %s45, %s46
      %p50 = pneg %p44
      %p51 = scmp.eq.s32.totalorder %s9, 3
      %p52 = por %p50, %p51
      %p53 = scmp.ne.s32.totalorder %s45, %s48
      %p54 = scmp.eq.s32.totalorder %s9, 0
      %p55 = por %p53, %p54
      %p56 = scmp.ne.s32.totalorder %s45, %s48
      %p57 = scmp.eq.s32.totalorder %s14, 3
      %p58 = por %p56, %p57
      %p59 = scmp.ne.s32.totalorder %s48, %s49
      %p60 = scmp.eq.s32.totalorder %s14, 0
      %p61 = por %p59, %p60
      %p62 = scmp.ne.s32.totalorder %s48, %s49
      %p63 = scmp.eq.s32.totalorder %s15, 3
      %p64 = por %p62, %p63
      %p66 = scmp.ne.s32.totalorder %s49, %s65
      %p67 = scmp.eq.s32.totalorder %s15, 0
      %p68 = por %p66, %p67
      %s70 = sadd.s32 %s69, 1
      %p73 = scmp.eq.s32.totalorder %s9, 3
      %p74 = scmp.ne.s32.totalorder %s69, %s71
      %p75 = scmp.eq.s32.totalorder %s9, 0
      %p76 = por %p74, %p75
      %p77 = scmp.ne.s32.totalorder %s69, %s71
      %p78 = scmp.eq.s32.totalorder %s14, 3
      %p79 = por %p77, %p78
      %p80 = scmp.ne.s32.totalorder %s71, %s72
      %p81 = scmp.eq.s32.totalorder %s14, 0
      %p82 = por %p80, %p81
      %p83 = scmp.ne.s32.totalorder %s71, %s72
      %p84 = scmp.eq.s32.totalorder %s15, 3
      %p85 = por %p83, %p84
      %p87 = scmp.ne.s32.totalorder %s72, %s86
      %p88 = scmp.eq.s32.totalorder %s15, 0
      %p89 = por %p87, %p88
      %p90 = scmp.le.s32.totalorder 1, %s9
      %p91 = scmp.lt.s32.totalorder %s9, 5
      %p92 = pnand %p90, %p91
      %p93 = pneg %p92
      // Predicated region
      $region9: #{tpu_custom_call.1} parent=5 // pred_check
        _
      $region10: #{tpu_custom_call.1} parent=5 // pred_check_branch
        %95 = sbr.rel (%p92) target = $region12
      $region11: #{tpu_custom_call.1} parent=5 // pred_region
        %s96 = ssub.s32 %s9, 1
      $region12: #{tpu_custom_call.1} parent=5 // pred_fallthru
        _
      %p97 = scmp.lt.s32.totalorder %s9, 4
      // Predicated region
      $region13: #{tpu_custom_call.1} parent=5 // pred_check
        %p98 = pneg %p97
      $region14: #{tpu_custom_call.1} parent=5 // pred_check_branch
        %100 = sbr.rel (%p98) target = $region16
      $region15: #{tpu_custom_call.1} parent=5 // pred_region
        // Predicated region
        $region17: #{tpu_custom_call.1} parent=15 // pred_check
          %p101 = pneg %p29
        $region18: #{tpu_custom_call.1} parent=15 // pred_check_branch
          %103 = sbr.rel (%p101) target = $region20
        $region19: #{tpu_custom_call.1} parent=15 // pred_region
          %s104 = smul.u32 2, %s9
          %p105 = scmp.lt.s32.totalorder %s104, 7
          %s106 = scalar_select %p105, %s104, 7
          %s107 = smul.addr %s106, 8
          %s108 = scalar_lea.vmem %s0, %s107
          %s109 = smul.u32 2, %s9
        $region20: #{tpu_custom_call.1} parent=15 // pred_fallthru
          _
        // Predicated region
        $region21: #{tpu_custom_call.1} parent=15 // pred_check
          %p110 = pneg %p55
        $region22: #{tpu_custom_call.1} parent=15 // pred_check_branch
          %112 = sbr.rel (%p110) target = $region24
        $region23: #{tpu_custom_call.1} parent=15 // pred_region
          %s113 = smul.u32 2, %s9
          %p114 = scmp.lt.s32.totalorder %s113, 7
          %s115 = scalar_select %p114, %s113, 7
          %s116 = smul.addr %s115, 8
          %s117 = scalar_lea.vmem %s1, %s116
          %s118 = smul.u32 2, %s9
        $region24: #{tpu_custom_call.1} parent=15 // pred_fallthru
          _
      $region16: #{tpu_custom_call.1} parent=5 // pred_fallthru
        _
      %p119 = scmp.le.s32.totalorder 1, %s9
      %p120 = scmp.lt.s32.totalorder %s9, 5
      %p121 = pnand %p119, %p120
      %p122 = pneg %p121
      // Predicated region
      $region25: #{tpu_custom_call.1} parent=5 // pred_check
        _
      $region26: #{tpu_custom_call.1} parent=5 // pred_check_branch
        %124 = sbr.rel (%p121) target = $region28
      $region27: #{tpu_custom_call.1} parent=5 // pred_region
        %s125 = ssub.s32 %s9, 1
        %s126 = smul.u32 2, %s14
        %p127 = scmp.lt.s32.totalorder %s126, 7
        %s128 = scalar_select %p127, %s126, 7
        %s129 = smul.addr %s128, 8
        %s130 = scalar_lea.vmem %s0, %s129
        %p131 = pneg %p35
        %p132 = pneg %p32
        %s133 = smul.u32 2, %s14
        %p134 = scmp.lt.s32.totalorder %s133, 7
        %s135 = scalar_select %p134, %s133, 7
        %s136 = smul.addr %s135, 8
        %s137 = scalar_lea.vmem %s1, %s136
        %p138 = pneg %p61
        %p139 = pneg %p58
        %p140 = pneg %p82
        %p141 = pneg %p79
        %s142 = smul.u32 2, %s14
        %p143 = scmp.lt.s32.totalorder %s142, 7
        %s144 = scalar_select %p143, %s142, 7
        %s145 = smul.addr %s144, 8
        %s146 = scalar_lea.vmem %s0, %s145
        %s147 = smul.u32 2, %s14
        %s148 = smul.u32 2, %s14
        %p149 = scmp.lt.s32.totalorder %s148, 7
        %s150 = scalar_select %p149, %s148, 7
        %s151 = smul.addr %s150, 8
        %s152 = scalar_lea.vmem %s1, %s151
        %s153 = smul.u32 2, %s14
        %p154 = scmp.eq.s32.totalorder %s14, 0
        // Predicated region
        $region29: #{tpu_custom_call.1} parent=27 // pred_check
          %p155 = pneg %p154
        $region30: #{tpu_custom_call.1} parent=27 // pred_check_branch
          %157 = sbr.rel (%p155) target = $region32
        $region31: #{tpu_custom_call.1} parent=27 // pred_region
          %s158 = scalar_lea.smem [#allocation2], 0
          %159 = sst [smem:[%s158]] 0.0
        $region32: #{tpu_custom_call.1} parent=27 // pred_fallthru
          _
        %v160 = vld [vmem:[%s146] sm:$0xff]
        %v161 = vld [vmem:[%s146 + $0x8] sm:$0xff]
        %v162 = vld [vmem:[%s152] sm:$0xff]
        %v163 = vld [vmem:[%s152 + $0x8] sm:$0xff]
        %s164 = smul.u32 %s14, 16
        %v165 = vlaneseq
        %v166 = vshrl.u32 %v165, 7
        %v167 = vadd.s32 %v166, 8
        %v168 = vstv %s164
        %v169 = vadd.s32 %v168, %v166
        %v170 = vadd.s32 %v168, %v167
        %vm171 = vcmp.lt.s32.totalorder %v169, 60
        %vm172 = vcmp.lt.s32.totalorder %v170, 60
        %v173 = vsel %vm171, 1, 0
        %v174 = vsel %vm172, 1, 0
        %vm175 = vcmp.eq.s32.totalorder %v173, 1
        %vm176 = vcmp.eq.s32.totalorder %v174, 1
        %v177 = vsel %vm175, %v160, 0.0
        %v178 = vsel %vm176, %v161, 0.0
        %vm179 = vcmask 64512
        %v180 = vsel %vm179, %v177, -inf
        %181 = vmax.xlane.f32.xlu0 %v180
        %v182 = vpop.xlane.xlu0 %181
        %v183 = vsel %vm179, %v178, -inf
        %184 = vmax.xlane.f32.xlu0 %v183
        %v185 = vpop.xlane.xlu0 %184
        %v186 = vsub.f32 %v177, %v182
        %v187 = vsub.f32 %v178, %v185
        %v188 = vmul.f32 %v186, 1.442695
        %v189 = vpow.pop %v188
        %v190 = vmul.f32 %v187, 1.442695
        %v191 = vpow.pop %v190
        %v192 = vsel %vm179, %v189, 0.0
        %193 = vadd.xlane.f32.xlu0 %v192
        %v194 = vpop.xlane.xlu0 %193
        %v195 = vsel %vm179, %v191, 0.0
        %196 = vadd.xlane.f32.xlu0 %v195
        %v197 = vpop.xlane.xlu0 %196
        %v198 = vlog2.pop %v194
        %v199 = vmul.f32 %v198, 0.6931472
        %v200 = vlog2.pop %v197
        %v201 = vmul.f32 %v200, 0.6931472
        %v202 = vlaneseq
        %v203 = vand.u32 %v202, 127
        %204 = vset.pattern.permute.xlu0 0
        %205 = vperm.xlu0 %204, %v162
        %v206 = vpop.permute.xlu0 %205
        %207 = vset.pattern.permute.xlu0 0
        %208 = vperm.xlu0 %207, %v163
        %v209 = vpop.permute.xlu0 %208
        %vm210 = vcmp.eq.s32.totalorder %v203, %v206
        %vm211 = vcmp.eq.s32.totalorder %v203, %v209
        %v212 = vsel %vm210, %v186, 0.0
        %v213 = vsel %vm211, %v187, 0.0
        %v214 = vsel %vm179, %v212, 0.0
        %215 = vadd.xlane.f32.xlu0 %v214
        %v216 = vpop.xlane.xlu0 %215
        %v217 = vsel %vm179, %v213, 0.0
        %218 = vadd.xlane.f32.xlu0 %v217
        %v219 = vpop.xlane.xlu0 %218
        %v220 = vsub.f32 %v199, %v216
        %v221 = vsub.f32 %v201, %v219
        %v222 = vsub.f32 0.0, %v220
        %v223 = vsub.f32 0.0, %v221
        %v224 = vmul.f32 %v222, 1.442695
        %v225 = vpow.pop %v224
        %v226 = vmul.f32 %v223, 1.442695
        %v227 = vpow.pop %v226
        %v228 = vsub.f32 1.0, %v225
        %v229 = vsub.f32 1.0, %v227
        %v230 = vmul.f32 %v228, %v228
        %v231 = vmul.f32 %v229, %v229
        %v232 = vmul.f32 %v230, %v220
        %v233 = vmul.f32 %v231, %v221
        %v234 = vsel %vm171, %v232, 0.0
        %v235 = vsel %vm172, %v233, 0.0
        %s236 = sld [smem:[#allocation2]]
        %vm237 = vcmask 7168
        %v238 = vsel %vm237, %v234, 0.0
        %v239 = vsel %vm237, %v235, 0.0
        %v240 = vadd.f32 %v238, %v239
        %241 = vadd.xlane.f32.xlu0 %v240
        %v242 = vpop.xlane.xlu0 %241
        %v243 = vrot.slane %v242, 4
        %v244 = vadd.f32 %v242, %v243
        %v245 = vrot.slane %v244, 2
        %v246 = vadd.f32 %v244, %v245
        %v247 = vrot.slane %v246, 1
        %v248 = vadd.f32 %v246, %v247
        %s249 = vtos %v248
        %s250 = sadd.f32 %s236, %s249
        %s251 = scalar_lea.smem [#allocation2], 0
        %252 = sst [smem:[%s251]] %s250
        %p253 = scmp.eq.s32.totalorder %s14, 3
        // Predicated region
        $region33: #{tpu_custom_call.1} parent=27 // pred_check
          %p254 = pneg %p253
        $region34: #{tpu_custom_call.1} parent=27 // pred_check_branch
          %256 = sbr.rel (%p254) target = $region36
        $region35: #{tpu_custom_call.1} parent=27 // pred_region
          %s257 = sld [smem:[#allocation2]]
          %s258 = smul.f32 %s257, 0.016666668
          %s259 = scalar_lea.smem [#allocation3], 0
          %260 = sst [smem:[%s259]] %s258
        $region36: #{tpu_custom_call.1} parent=27 // pred_fallthru
          _
        // Predicated region
        $region37: #{tpu_custom_call.1} parent=27 // pred_check
          %p261 = pneg %p79
        $region38: #{tpu_custom_call.1} parent=27 // pred_check_branch
          %263 = sbr.rel (%p261) target = $region40
        $region39: #{tpu_custom_call.1} parent=27 // pred_region
          %s265 = ssub.s32 16, 16
          %266 = vsyncadd [#allocation4], %s265
          %269 = dma.smem_to_hbm [#allocation3], 16, %s2, [#allocation4]
        $region40: #{tpu_custom_call.1} parent=27 // pred_fallthru
          _
        // Predicated region
        $region41: #{tpu_custom_call.1} parent=27 // pred_check
          %p270 = pneg %p79
        $region42: #{tpu_custom_call.1} parent=27 // pred_check_branch
          %272 = sbr.rel (%p270) target = $region44
        $region43: #{tpu_custom_call.1} parent=27 // pred_region
          %273 = dma.done [#allocation4], 16
        $region44: #{tpu_custom_call.1} parent=27 // pred_fallthru
          _
        %274 = sfence
      $region28: #{tpu_custom_call.1} parent=5 // pred_fallthru
        _
      %p275 = scmp.le.s32.totalorder 2, %s9
      // Predicated region
      $region45: #{tpu_custom_call.1} parent=5 // pred_check
        %p276 = pneg %p275
      $region46: #{tpu_custom_call.1} parent=5 // pred_check_branch
        %278 = sbr.rel (%p276) target = $region48
      $region47: #{tpu_custom_call.1} parent=5 // pred_region
        %s279 = ssub.s32 %s9, 2
      $region48: #{tpu_custom_call.1} parent=5 // pred_fallthru
        _
    $region6: #{tpu_custom_call.1} parent=1 // loop_footer
      %s13 = sadd.s32 1, %s9
    $region7: #{tpu_custom_call.1} parent=1 // loop_footer_branch
      %8 = sbr.rel target = $region3
    $region8: #{tpu_custom_call.1} parent=1 // loop_exit
      _
    %280 = vsyncpa [#allocation4], 1
    %s281 = scalar_lea.sflag [#allocation4], 1
    %282 = vsyncpa %s281, 1

</llo_original>
